<compile_context>
chip_gen: v5e
topology: v5e:2x2
jax: 0.10.0
libtpu: 0.0.40
codegen_flags: <defaults>
</compile_context>

<pallas_src>
import math

import numpy as np

import jax
import jax.numpy as jnp
from jax import lax
from jax.experimental import pallas as pl
from jax.experimental.pallas import tpu as pltpu  # noqa: F401  (TPU backend assumed)

# ---------------- configuration (small, consistent with the module) ----------------
B = 2                      # batch
NQ = 4                     # n_q codebooks (K)
T = 8                      # input timesteps
DELAYS = [0, 1, 2, 3]      # pattern_provider.delays
CARD = 32                  # lm_model.card
SPECIAL_TOKEN = CARD       # lm_model.special_token_id
DIM = 32                   # lm_model.dim
NUM_HEADS = 4              # transformer.layers[0].self_attn.num_heads
HEAD_DIM = DIM // NUM_HEADS
MLP = 4 * DIM
NEG_VALUE = -10000.0       # registered buffer 'neg_value'
MAX_DELAY = max(DELAYS)
S = T + MAX_DELAY          # pattern sequence length
LN_EPS = 1e-5

BS = B * S                 # all key/value rows (both batch elements stacked along sublanes)
BK = B * NQ                # selected query rows (last reverted step per codebook, per batch)
HB = NUM_HEADS * BK        # head-stacked query rows
NC = NQ * CARD             # 128-lane fused output slab

# ---------------- static-config constants (numpy, built ONCE at import) ----------------
_DELAYS = np.asarray(DELAYS, np.int64)
_SRC = np.arange(S)[None, :] - _DELAYS[:, None]                       # (NQ, S)
_PATTERN_MASK_NP = (_SRC >= 0) & (_SRC < T)                           # (NQ, S)
_SRC_CLIP_NP = np.clip(_SRC, 0, T - 1).astype(np.int32)
_LAST_IDX = (T - 1) + _DELAYS                                         # (NQ,)
_VALIDK_NP = ((_PATTERN_MASK_NP.sum(axis=1) - 1) >= 0).astype(np.float32)
_SEL_ROWS = (np.arange(B)[:, None] * S + _LAST_IDX[None, :]).reshape(-1)   # (BK,) order (b, k)

# attention bias: query row (b,k) attends key row (b', s) iff b'==b and s <= last_idx[k]
_rb = np.repeat(np.arange(B), NQ)
_rl = np.tile(_LAST_IDX, B)
_cb = np.repeat(np.arange(B), S)
_cs = np.tile(np.arange(S), B)
_BIAS_NP = np.where((_rb[:, None] == _cb[None, :]) & (_cs[None, :] <= _rl[:, None]),
                    0.0, NEG_VALUE).astype(np.float32)                # (BK, BS)

_HEADMASK_NP = (np.arange(DIM)[None, :] // HEAD_DIM ==
                np.arange(NUM_HEADS)[:, None]).astype(np.float32)     # (NUM_HEADS, DIM)
_HMSTACK_NP = np.repeat(_HEADMASK_NP, BK, axis=0)                     # (HB, DIM)  row h*BK+i
_BIAS_STACK_NP = np.tile(_BIAS_NP, (NUM_HEADS, 1))                    # (HB, BS)
_SEL_NP = (np.arange(BS)[None, :] == _SEL_ROWS[:, None]).astype(np.float32)      # (BK, BS)
_RSEL_NP = np.tile(_SEL_NP, (NUM_HEADS, 1))                           # (HB, BS)
_GSEL_NP = (np.arange(BK)[None, :] // NQ == np.arange(B)[:, None]).astype(np.float32)  # (B, BK)

_blk = np.arange(NC) // CARD
_diag = (_blk[None, :] == np.arange(NQ)[:, None]).astype(np.float32)  # (NQ, NC)
_SELMASK_NP = np.tile(_diag * _VALIDK_NP[:, None], (B, 1))            # (BK, NC)
_NEGADD_NP = np.tile(((1.0 - _VALIDK_NP[_blk]) * NEG_VALUE)[None, :], (B, 1)).astype(np.float32)

# ---------------- packed-slab layout (all section offsets 8-row aligned) ----------------
# narrow slab: 32-lane-wide sections
WQ_OFF = 0
WK_OFF = WQ_OFF + DIM
WV_OFF = WK_OFF + DIM
WO_OFF = WV_OFF + DIM
W2_OFF = WO_OFF + DIM
LN_OFF = W2_OFF + MLP            # 4 rows used: ln1g, ln1b, ln2g, ln2b
HMS_OFF = LN_OFF + 8             # head-stacked lane masks          (HB, DIM)
RSEL_OFF = HMS_OFF + HB          # head-replicated row selection    (HB, lanes 0..BS)
SEL_OFF = RSEL_OFF + HB          # row selection                    (BK, lanes 0..BS)
GSEL_OFF = SEL_OFF + 8           # batch gather                     (B,  lanes 0..BK)
BIASS_OFF = GSEL_OFF + 8         # head-stacked attention bias      (HB, lanes 0..BS)
NSLAB_ROWS = BIASS_OFF + HB

# wide slab: 128-lane-wide sections
W1_OFF = 0
WOUT_OFF = W1_OFF + DIM
SELMASK_OFF = WOUT_OFF + DIM
NEGADD_OFF = SELMASK_OFF + BK
WSLAB_ROWS = NEGADD_OFF + 8


def _layernorm(x, g, b):
    mu = jnp.mean(x, axis=-1, keepdims=True)
    var = jnp.mean((x - mu) ** 2, axis=-1, keepdims=True)
    return (x - mu) * lax.rsqrt(var + LN_EPS) * g + b


# ---------------- Pallas kernel (gridless; 3 input DMAs, 1 lane-dense output) ----------------
def lm_kernel(x_ref, n_ref, w_ref, out_ref):
    # carve the packed slabs with static slices (zero-cost views, aligned offsets)
    wq = n_ref[WQ_OFF:WQ_OFF + DIM, :]
    wk = n_ref[WK_OFF:WK_OFF + DIM, :]
    wv = n_ref[WV_OFF:WV_OFF + DIM, :]
    wo = n_ref[WO_OFF:WO_OFF + DIM, :]
    w2 = n_ref[W2_OFF:W2_OFF + MLP, :]
    ln1g = n_ref[LN_OFF + 0:LN_OFF + 1, :]
    ln1b = n_ref[LN_OFF + 1:LN_OFF + 2, :]
    ln2g = n_ref[LN_OFF + 2:LN_OFF + 3, :]
    ln2b = n_ref[LN_OFF + 3:LN_OFF + 4, :]
    hms = n_ref[HMS_OFF:HMS_OFF + HB, :]
    rsel = n_ref[RSEL_OFF:RSEL_OFF + HB, 0:BS]
    sel = n_ref[SEL_OFF:SEL_OFF + BK, 0:BS]
    gsel = n_ref[GSEL_OFF:GSEL_OFF + B, 0:BK]
    biass = n_ref[BIASS_OFF:BIASS_OFF + HB, 0:BS]

    w1 = w_ref[W1_OFF:W1_OFF + DIM, :]
    wout = w_ref[WOUT_OFF:WOUT_OFF + DIM, :]
    selmask = w_ref[SELMASK_OFF:SELMASK_OFF + BK, :]
    negadd = w_ref[NEGADD_OFF:NEGADD_OFF + B, :]

    x_all = x_ref[...]                                                  # (BS, DIM)

    # --- pre-LN causal MHA; only the BK rows the output reads get queries ---
    a_all = _layernorm(x_all, ln1g, ln1b)                               # (BS, DIM)
    # exact 0/1 row selection on the (idle) MXU — replaces x_sel input + duplicated LayerNorm
    x_sel = jnp.dot(sel, x_all, preferred_element_type=jnp.float32)     # (BK, DIM)
    aq = jnp.dot(rsel, a_all, preferred_element_type=jnp.float32)       # (HB, DIM)

    qs = jnp.dot(aq, wq, preferred_element_type=jnp.float32) * hms      # (HB, DIM) per-head masked
    k = jnp.dot(a_all, wk, preferred_element_type=jnp.float32)          # (BS, DIM)
    v = jnp.dot(a_all, wv, preferred_element_type=jnp.float32)          # (BS, DIM)

    scale = 1.0 / math.sqrt(HEAD_DIM)
    # one score matmul for all heads (heads stacked along sublanes) -> single internal K transpose
    s = lax.dot_general(qs, k, (((1,), (1,)), ((), ())),
                        preferred_element_type=jnp.float32) * scale + biass     # (HB, BS)
    # one softmax over the whole stack: 2 cross-lane reductions total (not 2 per head)
    s = s - jnp.max(s, axis=-1, keepdims=True)
    p = jnp.exp(s)
    p = p * pl.reciprocal(jnp.sum(p, axis=-1, keepdims=True), approx=True)      # (HB, BS)

    # per-head context accumulated through masked-V matmuls (no lane concatenation)
    ctx = jnp.zeros((BK, DIM), jnp.float32)
    for h in range(NUM_HEADS):                       # static unroll; aligned sublane slices
        ph = p[h * BK:(h + 1) * BK, :]               # (BK, BS)
        hm = hms[h * BK:h * BK + 1, :]               # (1, DIM)
        ctx = ctx + jnp.dot(ph, v * hm, preferred_element_type=jnp.float32)
    h1 = x_sel + jnp.dot(ctx, wo, preferred_element_type=jnp.float32)   # (BK, DIM)

    # --- pre-LN MLP on the BK selected rows only (valid: single transformer layer) ---
    a2 = _layernorm(h1, ln2g, ln2b)
    m = jax.nn.gelu(jnp.dot(a2, w1, preferred_element_type=jnp.float32))
    h2 = h1 + jnp.dot(m, w2, preferred_element_type=jnp.float32)

    # --- all NQ output heads in one lane-dense matmul, block-diag select + validity mask ---
    logits = jnp.dot(h2, wout, preferred_element_type=jnp.float32)      # (BK, NC)
    out_ref[...] = jnp.dot(gsel, logits * selmask,
                           preferred_element_type=jnp.float32) + negadd  # (B, NC) lane-dense


# ---------------- one-time parameter packing (fusion + slab assembly, NOT per call) ----------------
def pack_params(params):
    wq_f = np.concatenate([np.asarray(params["wq"][h]) for h in range(NUM_HEADS)], axis=1)
    wk_f = np.concatenate([np.asarray(params["wk"][h]) for h in range(NUM_HEADS)], axis=1)
    wv_f = np.concatenate([np.asarray(params["wv"][h]) for h in range(NUM_HEADS)], axis=1)
    wo_f = np.concatenate([np.asarray(params["wo"][h]) for h in range(NUM_HEADS)], axis=0)
    wout_f = np.concatenate([np.asarray(params["wout"][q]) for q in range(NQ)], axis=1)

    nslab = np.zeros((NSLAB_ROWS, DIM), np.float32)
    nslab[WQ_OFF:WQ_OFF + DIM] = wq_f
    nslab[WK_OFF:WK_OFF + DIM] = wk_f
    nslab[WV_OFF:WV_OFF + DIM] = wv_f
    nslab[WO_OFF:WO_OFF + DIM] = wo_f
    nslab[W2_OFF:W2_OFF + MLP] = np.asarray(params["w2"])
    nslab[LN_OFF + 0] = np.asarray(params["ln1g"])[0]
    nslab[LN_OFF + 1] = np.asarray(params["ln1b"])[0]
    nslab[LN_OFF + 2] = np.asarray(params["ln2g"])[0]
    nslab[LN_OFF + 3] = np.asarray(params["ln2b"])[0]
    nslab[HMS_OFF:HMS_OFF + HB] = _HMSTACK_NP
    nslab[RSEL_OFF:RSEL_OFF + HB, :BS] = _RSEL_NP
    nslab[SEL_OFF:SEL_OFF + BK, :BS] = _SEL_NP
    nslab[GSEL_OFF:GSEL_OFF + B, :BK] = _GSEL_NP
    nslab[BIASS_OFF:BIASS_OFF + HB, :BS] = _BIAS_STACK_NP

    wslab = np.zeros((WSLAB_ROWS, NC), np.float32)
    wslab[W1_OFF:W1_OFF + DIM] = np.asarray(params["w1"])
    wslab[WOUT_OFF:WOUT_OFF + DIM] = wout_f
    wslab[SELMASK_OFF:SELMASK_OFF + BK] = _SELMASK_NP
    wslab[NEGADD_OFF:NEGADD_OFF + B] = _NEGADD_NP

    return {
        "emb": params["emb"],
        "nslab": jnp.asarray(nslab),
        "wslab": jnp.asarray(wslab),
        "src_clip": jnp.asarray(_SRC_CLIP_NP),
        "pattern_mask": jnp.asarray(_PATTERN_MASK_NP),
    }


# ---------------- per-call path: pattern build + embedding (gather glue) + one pallas_call ----------------
@jax.jit
def lm_inference(sequence, packed):
    gathered = jnp.take_along_axis(
        sequence, jnp.broadcast_to(packed["src_clip"][None], (B, NQ, S)), axis=2)
    codes = jnp.where(packed["pattern_mask"][None], gathered, SPECIAL_TOKEN)   # (B, NQ, S)

    x = jnp.zeros((B, S, DIM), jnp.float32)
    for q in range(NQ):
        x = x + packed["emb"][q][codes[:, q, :]]
    x_flat = x.reshape(BS, DIM)

    out_flat = pl.pallas_call(
        lm_kernel,
        out_shape=jax.ShapeDtypeStruct((B, NC), jnp.float32),
    )(x_flat, packed["nslab"], packed["wslab"])

    return out_flat.reshape(B, NQ, CARD)


# ---------------- pure-JAX reference (straightforward full-sequence computation) ----------------
def lm_inference_ref(sequence, params):
    src_clip = jnp.asarray(_SRC_CLIP_NP)
    pmask = jnp.asarray(_PATTERN_MASK_NP)
    gathered = jnp.take_along_axis(
        sequence, jnp.broadcast_to(src_clip[None], (B, NQ, S)), axis=2)
    codes = jnp.where(pmask[None], gathered, SPECIAL_TOKEN)

    x = jnp.zeros((B, S, DIM), jnp.float32)
    for q in range(NQ):
        x = x + params["emb"][q][codes[:, q, :]]

    a = _layernorm(x, params["ln1g"], params["ln1b"])
    row = jnp.arange(S)[:, None]
    col = jnp.arange(S)[None, :]
    causal = jnp.where(col <= row, 0.0, NEG_VALUE).astype(jnp.float32)
    scale = 1.0 / math.sqrt(HEAD_DIM)
    attn = jnp.zeros((B, S, DIM), jnp.float32)
    for h in range(NUM_HEADS):
        qh = jnp.einsum("bsd,de->bse", a, params["wq"][h])
        kh = jnp.einsum("bsd,de->bse", a, params["wk"][h])
        vh = jnp.einsum("bsd,de->bse", a, params["wv"][h])
        sc = jnp.einsum("bqe,bke->bqk", qh, kh) * scale + causal
        p = jax.nn.softmax(sc, axis=-1)
        ctx = jnp.einsum("bqk,bke->bqe", p, vh)
        attn = attn + jnp.einsum("bqe,ed->bqd", ctx, params["wo"][h])
    h_ = x + attn

    a2 = _layernorm(h_, params["ln2g"], params["ln2b"])
    m = jax.nn.gelu(jnp.einsum("bsd,dm->bsm", a2, params["w1"]))
    h_ = h_ + jnp.einsum("bsm,md->bsd", m, params["w2"])

    logits = jnp.einsum("bsd,kdc->bksc", h_, params["wout"])          # (B, NQ, S, CARD)
    # revert_pattern_logits + [..., -1, :]: timestep T-1 of codebook k lives at step T-1+delays[k]
    last = jnp.stack([logits[:, q, (T - 1) + DELAYS[q], :] for q in range(NQ)], axis=1)
    validk = jnp.asarray(_VALIDK_NP)[None, :, None]
    return last * validk + (1.0 - validk) * NEG_VALUE


# ---------------- deterministic parameter init ----------------
def make_params(key):
    ks = jax.random.split(key, 12)
    n = lambda k, shape, s=0.05: (s * jax.random.normal(k, shape, jnp.float32))
    return {
        "emb":  n(ks[0], (NQ, CARD + 1, DIM), 0.1),
        "wq":   n(ks[1], (NUM_HEADS, DIM, HEAD_DIM)),
        "wk":   n(ks[2], (NUM_HEADS, DIM, HEAD_DIM)),
        "wv":   n(ks[3], (NUM_HEADS, DIM, HEAD_DIM)),
        "wo":   n(ks[4], (NUM_HEADS, HEAD_DIM, DIM)),
        "ln1g": jnp.ones((1, DIM), jnp.float32),
        "ln1b": jnp.zeros((1, DIM), jnp.float32),
        "w1":   n(ks[5], (DIM, MLP)),
        "w2":   n(ks[6], (MLP, DIM)),
        "ln2g": jnp.ones((1, DIM), jnp.float32),
        "ln2b": jnp.zeros((1, DIM), jnp.float32),
        "wout": n(ks[7], (NQ, DIM, CARD), 0.1),
    }


if __name__ == "__main__":
    key = jax.random.PRNGKey(0)
    pkey, skey = jax.random.split(key)
    params = make_params(pkey)
    packed = pack_params(params)        # one-time weight fusion + slab packing (not per call)
    sequence = jax.random.randint(skey, (B, NQ, T), 0, CARD, dtype=jnp.int32)

    out = jax.block_until_ready(lm_inference(sequence, packed))
    ref = jax.block_until_ready(lm_inference_ref(sequence, params))

    assert out.shape == (B, NQ, CARD), out.shape
    max_err = float(jnp.max(jnp.abs(out - ref)))
    assert jnp.allclose(out, ref, atol=2e-2, rtol=2e-2), max_err
    print("KERNEL_OK")
</pallas_src>

<mosaic_0001>
module attributes {stable_mosaic.version = 11 : i64} {
  func.func @lm_kernel(%arg0: memref<22x32xf32, #tpu.memory_space<vmem>>, %arg1: memref<376x32xf32, #tpu.memory_space<vmem>>, %arg2: memref<80x128xf32, #tpu.memory_space<vmem>>, %arg3: memref<2x128xf32, #tpu.memory_space<vmem>>) attributes {dimension_semantics = [], scalar_prefetch = 0 : i64, scratch_operands = 0 : i64, tpu.core_type = #tpu.core_type<tc>} {
    %c0 = arith.constant 0 : index
    %c0_0 = arith.constant 0 : index
    %0 = vector.load %arg1[%c0, %c0_0] : memref<376x32xf32, #tpu.memory_space<vmem>>, vector<32x32xf32>
    %c32 = arith.constant 32 : index
    %c0_1 = arith.constant 0 : index
    %1 = vector.load %arg1[%c32, %c0_1] : memref<376x32xf32, #tpu.memory_space<vmem>>, vector<32x32xf32>
    %c64 = arith.constant 64 : index
    %c0_2 = arith.constant 0 : index
    %2 = vector.load %arg1[%c64, %c0_2] : memref<376x32xf32, #tpu.memory_space<vmem>>, vector<32x32xf32>
    %c96 = arith.constant 96 : index
    %c0_3 = arith.constant 0 : index
    %3 = vector.load %arg1[%c96, %c0_3] : memref<376x32xf32, #tpu.memory_space<vmem>>, vector<32x32xf32>
    %c128 = arith.constant 128 : index
    %c0_4 = arith.constant 0 : index
    %4 = vector.load %arg1[%c128, %c0_4] : memref<376x32xf32, #tpu.memory_space<vmem>>, vector<128x32xf32>
    %c256 = arith.constant 256 : index
    %c0_5 = arith.constant 0 : index
    %5 = vector.load %arg1[%c256, %c0_5] : memref<376x32xf32, #tpu.memory_space<vmem>>, vector<1x32xf32>
    %c257 = arith.constant 257 : index
    %c0_6 = arith.constant 0 : index
    %6 = vector.load %arg1[%c257, %c0_6] : memref<376x32xf32, #tpu.memory_space<vmem>>, vector<1x32xf32>
    %c258 = arith.constant 258 : index
    %c0_7 = arith.constant 0 : index
    %7 = vector.load %arg1[%c258, %c0_7] : memref<376x32xf32, #tpu.memory_space<vmem>>, vector<1x32xf32>
    %c259 = arith.constant 259 : index
    %c0_8 = arith.constant 0 : index
    %8 = vector.load %arg1[%c259, %c0_8] : memref<376x32xf32, #tpu.memory_space<vmem>>, vector<1x32xf32>
    %c264 = arith.constant 264 : index
    %c0_9 = arith.constant 0 : index
    %9 = vector.load %arg1[%c264, %c0_9] : memref<376x32xf32, #tpu.memory_space<vmem>>, vector<32x32xf32>
    %c296 = arith.constant 296 : index
    %c0_10 = arith.constant 0 : index
    %10 = vector.load %arg1[%c296, %c0_10] : memref<376x32xf32, #tpu.memory_space<vmem>>, vector<32x22xf32>
    %c328 = arith.constant 328 : index
    %c0_11 = arith.constant 0 : index
    %11 = vector.load %arg1[%c328, %c0_11] : memref<376x32xf32, #tpu.memory_space<vmem>>, vector<8x22xf32>
    %c336 = arith.constant 336 : index
    %c0_12 = arith.constant 0 : index
    %12 = vector.load %arg1[%c336, %c0_12] : memref<376x32xf32, #tpu.memory_space<vmem>>, vector<2x8xf32>
    %c344 = arith.constant 344 : index
    %c0_13 = arith.constant 0 : index
    %13 = vector.load %arg1[%c344, %c0_13] : memref<376x32xf32, #tpu.memory_space<vmem>>, vector<32x22xf32>
    %c0_14 = arith.constant 0 : index
    %c0_15 = arith.constant 0 : index
    %14 = vector.load %arg2[%c0_14, %c0_15] : memref<80x128xf32, #tpu.memory_space<vmem>>, vector<32x128xf32>
    %c32_16 = arith.constant 32 : index
    %c0_17 = arith.constant 0 : index
    %15 = vector.load %arg2[%c32_16, %c0_17] : memref<80x128xf32, #tpu.memory_space<vmem>>, vector<32x128xf32>
    %c64_18 = arith.constant 64 : index
    %c0_19 = arith.constant 0 : index
    %16 = vector.load %arg2[%c64_18, %c0_19] : memref<80x128xf32, #tpu.memory_space<vmem>>, vector<8x128xf32>
    %c72 = arith.constant 72 : index
    %c0_20 = arith.constant 0 : index
    %17 = vector.load %arg2[%c72, %c0_20] : memref<80x128xf32, #tpu.memory_space<vmem>>, vector<2x128xf32>
    %c0_21 = arith.constant 0 : index
    %c0_22 = arith.constant 0 : index
    %18 = vector.load %arg0[%c0_21, %c0_22] : memref<22x32xf32, #tpu.memory_space<vmem>>, vector<22x32xf32>
    %cst = arith.constant dense<0.000000e+00> : vector<22xf32>
    %19 = vector.multi_reduction <add>, %18, %cst [1] : vector<22x32xf32> to vector<22xf32>
    %20 = vector.shape_cast %19 : vector<22xf32> to vector<22x1xf32>
    %cst_23 = arith.constant 3.200000e+01 : f32
    %21 = vector.broadcast %cst_23 : f32 to vector<22x1xf32>
    %22 = arith.divf %20, %21 : vector<22x1xf32>
    %23 = vector.broadcast %22 : vector<22x1xf32> to vector<22x32xf32>
    %24 = arith.subf %18, %23 : vector<22x32xf32>
    %25 = arith.mulf %24, %24 : vector<22x32xf32>
    %cst_24 = arith.constant dense<0.000000e+00> : vector<22xf32>
    %26 = vector.multi_reduction <add>, %25, %cst_24 [1] : vector<22x32xf32> to vector<22xf32>
    %27 = vector.shape_cast %26 : vector<22xf32> to vector<22x1xf32>
    %cst_25 = arith.constant 3.200000e+01 : f32
    %28 = vector.broadcast %cst_25 : f32 to vector<22x1xf32>
    %29 = arith.divf %27, %28 : vector<22x1xf32>
    %30 = vector.broadcast %22 : vector<22x1xf32> to vector<22x32xf32>
    %31 = arith.subf %18, %30 : vector<22x32xf32>
    %cst_26 = arith.constant 9.99999974E-6 : f32
    %32 = vector.broadcast %cst_26 : f32 to vector<22x1xf32>
    %33 = arith.addf %29, %32 : vector<22x1xf32>
    %34 = math.rsqrt %33 : vector<22x1xf32>
    %35 = vector.broadcast %34 : vector<22x1xf32> to vector<22x32xf32>
    %36 = arith.mulf %31, %35 : vector<22x32xf32>
    %37 = vector.broadcast %5 : vector<1x32xf32> to vector<22x32xf32>
    %38 = arith.mulf %36, %37 : vector<22x32xf32>
    %39 = vector.broadcast %6 : vector<1x32xf32> to vector<22x32xf32>
    %40 = arith.addf %38, %39 : vector<22x32xf32>
    %cst_27 = arith.constant dense<0.000000e+00> : vector<8x32xf32>
    %41 = tpu.matmul %11, %18, %cst_27 {dimension_numbers = #tpu.dot_dimension_numbers<[1], [0], [0], [1], [0, 0, 1, 1], [], []>} : vector<8x22xf32>, vector<22x32xf32>, vector<8x32xf32> -> vector<8x32xf32>
    %cst_28 = arith.constant dense<0.000000e+00> : vector<32x32xf32>
    %42 = tpu.matmul %10, %40, %cst_28 {dimension_numbers = #tpu.dot_dimension_numbers<[1], [0], [0], [1], [0, 0, 1, 1], [], []>} : vector<32x22xf32>, vector<22x32xf32>, vector<32x32xf32> -> vector<32x32xf32>
    %cst_29 = arith.constant dense<0.000000e+00> : vector<32x32xf32>
    %43 = tpu.matmul %42, %0, %cst_29 {dimension_numbers = #tpu.dot_dimension_numbers<[1], [0], [0], [1], [0, 0, 1, 1], [], []>} : vector<32x32xf32>, vector<32x32xf32>, vector<32x32xf32> -> vector<32x32xf32>
    %44 = arith.mulf %43, %9 : vector<32x32xf32>
    %cst_30 = arith.constant dense<0.000000e+00> : vector<22x32xf32>
    %45 = tpu.matmul %40, %1, %cst_30 {dimension_numbers = #tpu.dot_dimension_numbers<[1], [0], [0], [1], [0, 0, 1, 1], [], []>} : vector<22x32xf32>, vector<32x32xf32>, vector<22x32xf32> -> vector<22x32xf32>
    %cst_31 = arith.constant dense<0.000000e+00> : vector<22x32xf32>
    %46 = tpu.matmul %40, %2, %cst_31 {dimension_numbers = #tpu.dot_dimension_numbers<[1], [0], [0], [1], [0, 0, 1, 1], [], []>} : vector<22x32xf32>, vector<32x32xf32>, vector<22x32xf32> -> vector<22x32xf32>
    %cst_32 = arith.constant dense<0.000000e+00> : vector<32x22xf32>
    %47 = tpu.matmul %44, %45, %cst_32 {dimension_numbers = #tpu.dot_dimension_numbers<[1], [1], [0], [0], [0, 0, 1, 0], [], []>} : vector<32x32xf32>, vector<22x32xf32>, vector<32x22xf32> -> vector<32x22xf32>
    %cst_33 = arith.constant 0.353553385 : f32
    %48 = vector.broadcast %cst_33 : f32 to vector<32x22xf32>
    %49 = arith.mulf %47, %48 : vector<32x22xf32>
    %50 = arith.addf %49, %13 : vector<32x22xf32>
    %cst_34 = arith.constant dense<0xFF800000> : vector<32xf32>
    %51 = vector.multi_reduction <maximumf>, %50, %cst_34 [1] : vector<32x22xf32> to vector<32xf32>
    %52 = vector.shape_cast %51 : vector<32xf32> to vector<32x1xf32>
    %53 = vector.broadcast %52 : vector<32x1xf32> to vector<32x22xf32>
    %54 = arith.subf %50, %53 : vector<32x22xf32>
    %55 = math.exp %54 : vector<32x22xf32>
    %cst_35 = arith.constant dense<0.000000e+00> : vector<32xf32>
    %56 = vector.multi_reduction <add>, %55, %cst_35 [1] : vector<32x22xf32> to vector<32xf32>
    %57 = vector.shape_cast %56 : vector<32xf32> to vector<32x1xf32>
    %58 = tpu.reciprocal %57 {approx = true} : vector<32x1xf32> -> vector<32x1xf32>
    %59 = vector.broadcast %58 : vector<32x1xf32> to vector<32x22xf32>
    %60 = arith.mulf %55, %59 : vector<32x22xf32>
    %cst_36 = arith.constant 0.000000e+00 : f32
    %61 = vector.broadcast %cst_36 : f32 to vector<8x32xf32>
    %62 = vector.extract_strided_slice %60 {offsets = [0, 0], sizes = [8, 22], strides = [1, 1]} : vector<32x22xf32> to vector<8x22xf32>
    %63 = vector.extract_strided_slice %9 {offsets = [0, 0], sizes = [1, 32], strides = [1, 1]} : vector<32x32xf32> to vector<1x32xf32>
    %64 = vector.broadcast %63 : vector<1x32xf32> to vector<22x32xf32>
    %65 = arith.mulf %46, %64 : vector<22x32xf32>
    %cst_37 = arith.constant dense<0.000000e+00> : vector<8x32xf32>
    %66 = tpu.matmul %62, %65, %cst_37 {dimension_numbers = #tpu.dot_dimension_numbers<[1], [0], [0], [1], [0, 0, 1, 1], [], []>} : vector<8x22xf32>, vector<22x32xf32>, vector<8x32xf32> -> vector<8x32xf32>
    %67 = arith.addf %61, %66 : vector<8x32xf32>
    %68 = vector.extract_strided_slice %60 {offsets = [8, 0], sizes = [8, 22], strides = [1, 1]} : vector<32x22xf32> to vector<8x22xf32>
    %69 = vector.extract_strided_slice %9 {offsets = [8, 0], sizes = [1, 32], strides = [1, 1]} : vector<32x32xf32> to vector<1x32xf32>
    %70 = vector.broadcast %69 : vector<1x32xf32> to vector<22x32xf32>
    %71 = arith.mulf %46, %70 : vector<22x32xf32>
    %cst_38 = arith.constant dense<0.000000e+00> : vector<8x32xf32>
    %72 = tpu.matmul %68, %71, %cst_38 {dimension_numbers = #tpu.dot_dimension_numbers<[1], [0], [0], [1], [0, 0, 1, 1], [], []>} : vector<8x22xf32>, vector<22x32xf32>, vector<8x32xf32> -> vector<8x32xf32>
    %73 = arith.addf %67, %72 : vector<8x32xf32>
    %74 = vector.extract_strided_slice %60 {offsets = [16, 0], sizes = [8, 22], strides = [1, 1]} : vector<32x22xf32> to vector<8x22xf32>
    %75 = vector.extract_strided_slice %9 {offsets = [16, 0], sizes = [1, 32], strides = [1, 1]} : vector<32x32xf32> to vector<1x32xf32>
    %76 = vector.broadcast %75 : vector<1x32xf32> to vector<22x32xf32>
    %77 = arith.mulf %46, %76 : vector<22x32xf32>
    %cst_39 = arith.constant dense<0.000000e+00> : vector<8x32xf32>
    %78 = tpu.matmul %74, %77, %cst_39 {dimension_numbers = #tpu.dot_dimension_numbers<[1], [0], [0], [1], [0, 0, 1, 1], [], []>} : vector<8x22xf32>, vector<22x32xf32>, vector<8x32xf32> -> vector<8x32xf32>
    %79 = arith.addf %73, %78 : vector<8x32xf32>
    %80 = vector.extract_strided_slice %60 {offsets = [24, 0], sizes = [8, 22], strides = [1, 1]} : vector<32x22xf32> to vector<8x22xf32>
    %81 = vector.extract_strided_slice %9 {offsets = [24, 0], sizes = [1, 32], strides = [1, 1]} : vector<32x32xf32> to vector<1x32xf32>
    %82 = vector.broadcast %81 : vector<1x32xf32> to vector<22x32xf32>
    %83 = arith.mulf %46, %82 : vector<22x32xf32>
    %cst_40 = arith.constant dense<0.000000e+00> : vector<8x32xf32>
    %84 = tpu.matmul %80, %83, %cst_40 {dimension_numbers = #tpu.dot_dimension_numbers<[1], [0], [0], [1], [0, 0, 1, 1], [], []>} : vector<8x22xf32>, vector<22x32xf32>, vector<8x32xf32> -> vector<8x32xf32>
    %85 = arith.addf %79, %84 : vector<8x32xf32>
    %cst_41 = arith.constant dense<0.000000e+00> : vector<8x32xf32>
    %86 = tpu.matmul %85, %3, %cst_41 {dimension_numbers = #tpu.dot_dimension_numbers<[1], [0], [0], [1], [0, 0, 1, 1], [], []>} : vector<8x32xf32>, vector<32x32xf32>, vector<8x32xf32> -> vector<8x32xf32>
    %87 = arith.addf %41, %86 : vector<8x32xf32>
    %cst_42 = arith.constant dense<0.000000e+00> : vector<8xf32>
    %88 = vector.multi_reduction <add>, %87, %cst_42 [1] : vector<8x32xf32> to vector<8xf32>
    %89 = vector.shape_cast %88 : vector<8xf32> to vector<8x1xf32>
    %cst_43 = arith.constant 3.200000e+01 : f32
    %90 = vector.broadcast %cst_43 : f32 to vector<8x1xf32>
    %91 = arith.divf %89, %90 : vector<8x1xf32>
    %92 = vector.broadcast %91 : vector<8x1xf32> to vector<8x32xf32>
    %93 = arith.subf %87, %92 : vector<8x32xf32>
    %94 = arith.mulf %93, %93 : vector<8x32xf32>
    %cst_44 = arith.constant dense<0.000000e+00> : vector<8xf32>
    %95 = vector.multi_reduction <add>, %94, %cst_44 [1] : vector<8x32xf32> to vector<8xf32>
    %96 = vector.shape_cast %95 : vector<8xf32> to vector<8x1xf32>
    %cst_45 = arith.constant 3.200000e+01 : f32
    %97 = vector.broadcast %cst_45 : f32 to vector<8x1xf32>
    %98 = arith.divf %96, %97 : vector<8x1xf32>
    %99 = vector.broadcast %91 : vector<8x1xf32> to vector<8x32xf32>
    %100 = arith.subf %87, %99 : vector<8x32xf32>
    %cst_46 = arith.constant 9.99999974E-6 : f32
    %101 = vector.broadcast %cst_46 : f32 to vector<8x1xf32>
    %102 = arith.addf %98, %101 : vector<8x1xf32>
    %103 = math.rsqrt %102 : vector<8x1xf32>
    %104 = vector.broadcast %103 : vector<8x1xf32> to vector<8x32xf32>
    %105 = arith.mulf %100, %104 : vector<8x32xf32>
    %106 = vector.broadcast %7 : vector<1x32xf32> to vector<8x32xf32>
    %107 = arith.mulf %105, %106 : vector<8x32xf32>
    %108 = vector.broadcast %8 : vector<1x32xf32> to vector<8x32xf32>
    %109 = arith.addf %107, %108 : vector<8x32xf32>
    %cst_47 = arith.constant dense<0.000000e+00> : vector<8x128xf32>
    %110 = tpu.matmul %109, %14, %cst_47 {dimension_numbers = #tpu.dot_dimension_numbers<[1], [0], [0], [1], [0, 0, 1, 1], [], []>} : vector<8x32xf32>, vector<32x128xf32>, vector<8x128xf32> -> vector<8x128xf32>
    %111 = arith.mulf %110, %110 : vector<8x128xf32>
    %112 = arith.mulf %110, %111 : vector<8x128xf32>
    %cst_48 = arith.constant 4.471500e-02 : f32
    %113 = vector.broadcast %cst_48 : f32 to vector<8x128xf32>
    %114 = arith.mulf %113, %112 : vector<8x128xf32>
    %115 = arith.addf %110, %114 : vector<8x128xf32>
    %cst_49 = arith.constant 0.797884583 : f32
    %116 = vector.broadcast %cst_49 : f32 to vector<8x128xf32>
    %117 = arith.mulf %116, %115 : vector<8x128xf32>
    %118 = math.tanh %117 : vector<8x128xf32>
    %cst_50 = arith.constant 1.000000e+00 : f32
    %119 = vector.broadcast %cst_50 : f32 to vector<8x128xf32>
    %120 = arith.addf %119, %118 : vector<8x128xf32>
    %cst_51 = arith.constant 5.000000e-01 : f32
    %121 = vector.broadcast %cst_51 : f32 to vector<8x128xf32>
    %122 = arith.mulf %121, %120 : vector<8x128xf32>
    %123 = arith.mulf %110, %122 : vector<8x128xf32>
    %cst_52 = arith.constant dense<0.000000e+00> : vector<8x32xf32>
    %124 = tpu.matmul %123, %4, %cst_52 {dimension_numbers = #tpu.dot_dimension_numbers<[1], [0], [0], [1], [0, 0, 1, 1], [], []>} : vector<8x128xf32>, vector<128x32xf32>, vector<8x32xf32> -> vector<8x32xf32>
    %125 = arith.addf %87, %124 : vector<8x32xf32>
    %cst_53 = arith.constant dense<0.000000e+00> : vector<8x128xf32>
    %126 = tpu.matmul %125, %15, %cst_53 {dimension_numbers = #tpu.dot_dimension_numbers<[1], [0], [0], [1], [0, 0, 1, 1], [], []>} : vector<8x32xf32>, vector<32x128xf32>, vector<8x128xf32> -> vector<8x128xf32>
    %127 = arith.mulf %126, %16 : vector<8x128xf32>
    %cst_54 = arith.constant dense<0.000000e+00> : vector<2x128xf32>
    %128 = tpu.matmul %12, %127, %cst_54 {dimension_numbers = #tpu.dot_dimension_numbers<[1], [0], [0], [1], [0, 0, 1, 1], [], []>} : vector<2x8xf32>, vector<8x128xf32>, vector<2x128xf32> -> vector<2x128xf32>
    %129 = arith.addf %128, %17 : vector<2x128xf32>
    %c0_55 = arith.constant 0 : index
    %c0_56 = arith.constant 0 : index
    %130 = vector.load %arg3[%c0_55, %c0_56] : memref<2x128xf32, #tpu.memory_space<vmem>>, vector<2x128xf32>
    tpu.vector_store %arg3[%c0_55, %c0_56], %129 {strides = array<i32>} : memref<2x128xf32, #tpu.memory_space<vmem>>, vector<2x128xf32>,
    return
  }
}

</mosaic_0001>

<llo_original>
// kernel: lm_inference.1
$region0: #{lm_inference.1}
  #allocation0 [shape = 'u32[]', space=smem, size = 0x4, offset = 0x4, fixed_abs, tag = 'smem constant byte address 0x4 - core index']
  #allocation1 [shape = 'u32[72,128]{1,0:T(1,128)}', space=vmem, size = 0x9000, scoped, tag = 'internal scratch']
  %s0 = inlined_call_operand.vmem [shape: f32[22,32], index: 0, kind: input, shape index: {}]
  %s1 = inlined_call_operand.vmem [shape: f32[376,32], index: 1, kind: input, shape index: {}]
  %s2 = inlined_call_operand.vmem [shape: f32[80,128], index: 2, kind: input, shape index: {}]
  %s3 = inlined_call_operand.vmem [shape: f32[2,128], index: 3, kind: output, shape index: {}]
  %s4 = sld [smem:[#allocation0]]
  $region22: #{lm_inference.1} parent=0
    _
  %s6 = ssub.s32 1, %s4
  %s7 = scalar_select 0, %s6, %s4
  // Predicated region
  $region2: #{lm_inference.1} parent=0 // pred_check
    _
  $region3: #{lm_inference.1} parent=0 // pred_check_branch
    %9 = sbr.rel (0) target = $region5
  $region4: #{lm_inference.1} parent=0 // pred_region
    _
  $region5: #{lm_inference.1} parent=0 // pred_fallthru
    _
  // Predicated region
  $region6: #{lm_inference.1} parent=0 // pred_check
    _
  $region7: #{lm_inference.1} parent=0 // pred_check_branch
    %11 = sbr.rel (0) target = $region9
  $region8: #{lm_inference.1} parent=0 // pred_region
    _
  $region9: #{lm_inference.1} parent=0 // pred_fallthru
    _
  // Predicated region
  $region10: #{lm_inference.1} parent=0 // pred_check
    _
  $region11: #{lm_inference.1} parent=0 // pred_check_branch
    %13 = sbr.rel (0) target = $region13
  $region12: #{lm_inference.1} parent=0 // pred_region
    _
  $region13: #{lm_inference.1} parent=0 // pred_fallthru
    _
  %v14 = vld [vmem:[%s1] sm:$0xff]
  %v15 = vld [vmem:[%s1 + $0x8] sm:$0xff]
  %v16 = vld [vmem:[%s1 + $0x10] sm:$0xff]
  %v17 = vld [vmem:[%s1 + $0x18] sm:$0xff]
  %v18 = vld [vmem:[%s1 + $0x20] sm:$0xff]
  %v19 = vld [vmem:[%s1 + $0x28] sm:$0xff]
  %v20 = vld [vmem:[%s1 + $0x30] sm:$0xff]
  %v21 = vld [vmem:[%s1 + $0x38] sm:$0xff]
  %v22 = vld [vmem:[%s1 + $0x40] sm:$0xff]
  %v23 = vld [vmem:[%s1 + $0x48] sm:$0xff]
  %v24 = vld [vmem:[%s1 + $0x50] sm:$0xff]
  %v25 = vld [vmem:[%s1 + $0x58] sm:$0xff]
  %v26 = vld [vmem:[%s1 + $0x60] sm:$0xff]
  %v27 = vld [vmem:[%s1 + $0x68] sm:$0xff]
  %v28 = vld [vmem:[%s1 + $0x70] sm:$0xff]
  %v29 = vld [vmem:[%s1 + $0x78] sm:$0xff]
  %v30 = vld [vmem:[%s1 + $0x80] sm:$0xff]
  %v31 = vld [vmem:[%s1 + $0x88] sm:$0xff]
  %v32 = vld [vmem:[%s1 + $0x90] sm:$0xff]
  %v33 = vld [vmem:[%s1 + $0x98] sm:$0xff]
  %v34 = vld [vmem:[%s1 + $0xa0] sm:$0xff]
  %v35 = vld [vmem:[%s1 + $0xa8] sm:$0xff]
  %v36 = vld [vmem:[%s1 + $0xb0] sm:$0xff]
  %v37 = vld [vmem:[%s1 + $0xb8] sm:$0xff]
  %v38 = vld [vmem:[%s1 + $0xc0] sm:$0xff]
  %v39 = vld [vmem:[%s1 + $0xc8] sm:$0xff]
  %v40 = vld [vmem:[%s1 + $0xd0] sm:$0xff]
  %v41 = vld [vmem:[%s1 + $0xd8] sm:$0xff]
  %v42 = vld [vmem:[%s1 + $0xe0] sm:$0xff]
  %v43 = vld [vmem:[%s1 + $0xe8] sm:$0xff]
  %v44 = vld [vmem:[%s1 + $0xf0] sm:$0xff]
  %v45 = vld [vmem:[%s1 + $0xf8] sm:$0xff]
  %v46 = vld [vmem:[%s1 + $0x100] sm:$0x1]
  %v47 = vld [vmem:[%s1 + $0x101] sm:$0x1]
  %v48 = vld [vmem:[%s1 + $0x102] sm:$0x1]
  %v49 = vld [vmem:[%s1 + $0x103] sm:$0x1]
  %v50 = vld [vmem:[%s1 + $0x108] sm:$0xff]
  %v51 = vld [vmem:[%s1 + $0x110] sm:$0xff]
  %v52 = vld [vmem:[%s1 + $0x118] sm:$0xff]
  %v53 = vld [vmem:[%s1 + $0x120] sm:$0xff]
  %v54 = vld [vmem:[%s1 + $0x128] sm:$0xff]
  %v55 = vld [vmem:[%s1 + $0x130] sm:$0xff]
  %v56 = vld [vmem:[%s1 + $0x138] sm:$0xff]
  %v57 = vld [vmem:[%s1 + $0x140] sm:$0xff]
  %v58 = vld [vmem:[%s1 + $0x148] sm:$0xff]
  %v59 = vld [vmem:[%s1 + $0x150] sm:$0x3]
  %v60 = vld [vmem:[%s1 + $0x158] sm:$0xff]
  %v61 = vld [vmem:[%s1 + $0x160] sm:$0xff]
  %v62 = vld [vmem:[%s1 + $0x168] sm:$0xff]
  %v63 = vld [vmem:[%s1 + $0x170] sm:$0xff]
  %v64 = vld [vmem:[%s2] sm:$0xff]
  %v65 = vld [vmem:[%s2 + $0x8] sm:$0xff]
  %v66 = vld [vmem:[%s2 + $0x10] sm:$0xff]
  %v67 = vld [vmem:[%s2 + $0x18] sm:$0xff]
  %v68 = vld [vmem:[%s2 + $0x20] sm:$0xff]
  %v69 = vld [vmem:[%s2 + $0x28] sm:$0xff]
  %v70 = vld [vmem:[%s2 + $0x30] sm:$0xff]
  %v71 = vld [vmem:[%s2 + $0x38] sm:$0xff]
  %v72 = vld [vmem:[%s2 + $0x40] sm:$0xff]
  %v73 = vld [vmem:[%s2 + $0x48] sm:$0x3]
  %v74 = vld [vmem:[%s0] sm:$0xff]
  %v75 = vld [vmem:[%s0 + $0x8] sm:$0xff]
  %v76 = vld [vmem:[%s0 + $0x10] sm:$0x3f]
  %vm77 = vcmask 261120
  %v78 = vsel %vm77, %v74, 0.0
  %79 = vadd.xlane.f32.xlu0 %v78
  %v80 = vpop.xlane.xlu0 %79
  %v81 = vsel %vm77, %v75, 0.0
  %82 = vadd.xlane.f32.xlu0 %v81
  %v83 = vpop.xlane.xlu0 %82
  %vm84 = vcmask 259072
  %v85 = vsel %vm84, %v76, 0.0
  %86 = vadd.xlane.f32.xlu0 %v85
  %v87 = vpop.xlane.xlu0 %86
  %v88 = vrcp.pop 32.0
  %v89 = vmul.f32 32.0, %v88
  %v90 = vsub.f32 1.0, %v89
  %v91 = vmul.f32 %v88, %v90
  %v92 = vadd.f32 %v88, %v91
  %vm93 = vweird.f32 %v88
  %v94 = vsel %vm93, %v88, %v92
  %v95 = vmul.f32 %v80, %v94
  %v96 = vmul.f32 %v83, %v94
  %v97 = vmul.f32 %v87, %v94
  %v98 = vsub.f32 %v74, %v95
  %v99 = vsub.f32 %v75, %v96
  %v100 = vsub.f32 %v76, %v97
  %v101 = vmul.f32 %v98, %v98
  %v102 = vmul.f32 %v99, %v99
  %v103 = vmul.f32 %v100, %v100
  %v104 = vsel %vm77, %v101, 0.0
  %105 = vadd.xlane.f32.xlu0 %v104
  %v106 = vpop.xlane.xlu0 %105
  %v107 = vsel %vm77, %v102, 0.0
  %108 = vadd.xlane.f32.xlu0 %v107
  %v109 = vpop.xlane.xlu0 %108
  %v110 = vsel %vm84, %v103, 0.0
  %111 = vadd.xlane.f32.xlu0 %v110
  %v112 = vpop.xlane.xlu0 %111
  %v113 = vmul.f32 %v106, %v94
  %v114 = vmul.f32 %v109, %v94
  %v115 = vmul.f32 %v112, %v94
  %v116 = vadd.f32 %v113, 1e-05
  %v117 = vadd.f32 %v114, 1e-05
  %v118 = vadd.f32 %v115, 1e-05
  %v119 = vrsqrt.pop %v116
  %v120 = vmul.f32 %v119, %v116
  %v121 = vmul.f32 %v120, %v119
  %v122 = vmul.f32 0.5, %v121
  %v123 = vsub.f32 1.5, %v122
  %v124 = vmul.f32 %v119, %v123
  %vm125 = vweird.f32 %v116
  %vm126 = vweird.f32 %v119
  %vm127 = vmor %vm125, %vm126
  %v128 = vsel %vm127, %v119, %v124
  %v129 = vrsqrt.pop %v117
  %v130 = vmul.f32 %v129, %v117
  %v131 = vmul.f32 %v130, %v129
  %v132 = vmul.f32 0.5, %v131
  %v133 = vsub.f32 1.5, %v132
  %v134 = vmul.f32 %v129, %v133
  %vm135 = vweird.f32 %v117
  %vm136 = vweird.f32 %v129
  %vm137 = vmor %vm135, %vm136
  %v138 = vsel %vm137, %v129, %v134
  %v139 = vrsqrt.pop %v118
  %v140 = vmul.f32 %v139, %v118
  %v141 = vmul.f32 %v140, %v139
  %v142 = vmul.f32 0.5, %v141
  %v143 = vsub.f32 1.5, %v142
  %v144 = vmul.f32 %v139, %v143
  %vm145 = vweird.f32 %v118
  %vm146 = vweird.f32 %v139
  %vm147 = vmor %vm145, %vm146
  %v148 = vsel %vm147, %v139, %v144
  %v149 = vmul.f32 %v98, %v128
  %v150 = vmul.f32 %v99, %v138
  %v151 = vmul.f32 %v100, %v148
  %v152 = vperm.slane %v46, 0
  %v153 = vmul.f32 %v149, %v152
  %v154 = vmul.f32 %v150, %v152
  %v155 = vmul.f32 %v151, %v152
  %v156 = vperm.slane %v47, 0
  %v157 = vadd.f32 %v153, %v156
  %v158 = vadd.f32 %v154, %v156
  %v159 = vadd.f32 %v155, %v156
  %vm160 = vcmask 179200
  %v162 = vsel %vm160, %v54, 0
  %v165 = vsel %vm160, %v55, 0
  %v168 = vsel %vm160, %v56, 0
  %v171 = vsel %vm160, %v57, 0
  %vm173 = vcmask 1045504
  %v175 = vsel %vm173, %v159, 0
  %177 = vmatpush.msra.mxu0 0.0
  %178 = vmatpush.msra.mxu0 0.0
  %179 = vmatpush.msra.mxu0 0.0
  %180 = vmatpush.msra.mxu0 0.0
  %181 = vmatpush.msra.mxu0 0.0
  %182 = vmatpush.msra.mxu0 0.0
  %183 = vmatpush.msra.mxu0 0.0
  %184 = vmatpush.msra.mxu0 0.0
  %185 = vmatpush.msra.mxu0 0.0
  %186 = vmatpush.msra.mxu0 0.0
  %187 = vmatpush.msra.mxu0 0.0
  %188 = vmatpush.msra.mxu0 0.0
  %189 = vmatpush.msra.mxu0 0.0
  %190 = vmatpush.msra.mxu0 %v175
  %191 = vmatpush.msra.mxu0 %v158
  %192 = vmatpush.msra.mxu0 %v157
  %193 = vmatmul.f32.gmra.mxu0 %v162
  %v194 = vpop.f32.mrf.mxu0
  %v195 = vadd.f32 0.0, %v194
  %196 = vmatmul.f32.gmra.mxu0 %v165
  %v197 = vpop.f32.mrf.mxu0
  %v198 = vadd.f32 0.0, %v197
  %199 = vmatmul.f32.gmra.mxu0 %v168
  %v200 = vpop.f32.mrf.mxu0
  %v201 = vadd.f32 0.0, %v200
  %202 = vmatmul.f32.gmra.mxu0 %v171
  %v203 = vpop.f32.mrf.mxu0
  %v204 = vadd.f32 0.0, %v203
  %205 = vdwg.mxu0
  %v207 = vsel %vm77, %v195, 0
  %v210 = vsel %vm77, %v198, 0
  %v213 = vsel %vm77, %v201, 0
  %v216 = vsel %vm77, %v204, 0
  %218 = vmatpush.msra.mxu0 0.0
  %219 = vmatpush.msra.mxu0 0.0
  %220 = vmatpush.msra.mxu0 0.0
  %221 = vmatpush.msra.mxu0 0.0
  %222 = vmatpush.msra.mxu0 0.0
  %223 = vmatpush.msra.mxu0 0.0
  %224 = vmatpush.msra.mxu0 0.0
  %225 = vmatpush.msra.mxu0 0.0
  %226 = vmatpush.msra.mxu0 0.0
  %227 = vmatpush.msra.mxu0 0.0
  %228 = vmatpush.msra.mxu0 0.0
  %229 = vmatpush.msra.mxu0 0.0
  %230 = vmatpush.msra.mxu0 %v17
  %231 = vmatpush.msra.mxu0 %v16
  %232 = vmatpush.msra.mxu0 %v15
  %233 = vmatpush.msra.mxu0 %v14
  %234 = vmatmul.f32.gmra.mxu0 %v207
  %v235 = vpop.f32.mrf.mxu0
  %v236 = vadd.f32 0.0, %v235
  %237 = vmatmul.f32.gmra.mxu0 %v210
  %v238 = vpop.f32.mrf.mxu0
  %v239 = vadd.f32 0.0, %v238
  %240 = vmatmul.f32.gmra.mxu0 %v213
  %v241 = vpop.f32.mrf.mxu0
  %v242 = vadd.f32 0.0, %v241
  %243 = vmatmul.f32.gmra.mxu0 %v216
  %v244 = vpop.f32.mrf.mxu0
  %v245 = vadd.f32 0.0, %v244
  %246 = vdwg.mxu0
  %v247 = vmul.f32 %v236, %v50
  %v248 = vmul.f32 %v239, %v51
  %v249 = vmul.f32 %v242, %v52
  %v250 = vmul.f32 %v245, %v53
  %v252 = vsel %vm77, %v157, 0
  %v255 = vsel %vm77, %v158, 0
  %v257 = vsel %vm77, %v159, 0
  %259 = vmatpush.msra.mxu0 0.0
  %260 = vmatpush.msra.mxu0 0.0
  %261 = vmatpush.msra.mxu0 0.0
  %262 = vmatpush.msra.mxu0 0.0
  %263 = vmatpush.msra.mxu0 0.0
  %264 = vmatpush.msra.mxu0 0.0
  %265 = vmatpush.msra.mxu0 0.0
  %266 = vmatpush.msra.mxu0 0.0
  %267 = vmatpush.msra.mxu0 0.0
  %268 = vmatpush.msra.mxu0 0.0
  %269 = vmatpush.msra.mxu0 0.0
  %270 = vmatpush.msra.mxu0 0.0
  %271 = vmatpush.msra.mxu0 %v21
  %272 = vmatpush.msra.mxu0 %v20
  %273 = vmatpush.msra.mxu0 %v19
  %274 = vmatpush.msra.mxu0 %v18
  %275 = vmatmul.f32.gmra.mxu0 %v252
  %v276 = vpop.f32.mrf.mxu0
  %v277 = vadd.f32 0.0, %v276
  %278 = vmatmul.f32.gmra.mxu0 %v255
  %v279 = vpop.f32.mrf.mxu0
  %v280 = vadd.f32 0.0, %v279
  %281 = vmatmul.f32.gmra.mxu0 %v257
  %v282 = vpop.f32.mrf.mxu0
  %v283 = vadd.f32 0.0, %v282
  %284 = vdwg.mxu0
  %285 = vmatpush.msra.mxu0 0.0
  %286 = vmatpush.msra.mxu0 0.0
  %287 = vmatpush.msra.mxu0 0.0
  %288 = vmatpush.msra.mxu0 0.0
  %289 = vmatpush.msra.mxu0 0.0
  %290 = vmatpush.msra.mxu0 0.0
  %291 = vmatpush.msra.mxu0 0.0
  %292 = vmatpush.msra.mxu0 0.0
  %293 = vmatpush.msra.mxu0 0.0
  %294 = vmatpush.msra.mxu0 0.0
  %295 = vmatpush.msra.mxu0 0.0
  %296 = vmatpush.msra.mxu0 0.0
  %297 = vmatpush.msra.mxu0 %v25
  %298 = vmatpush.msra.mxu0 %v24
  %299 = vmatpush.msra.mxu0 %v23
  %300 = vmatpush.msra.mxu0 %v22
  %301 = vmatmul.f32.gmra.mxu0 %v252
  %v302 = vpop.f32.mrf.mxu0
  %v303 = vadd.f32 0.0, %v302
  %304 = vmatmul.f32.gmra.mxu0 %v255
  %v305 = vpop.f32.mrf.mxu0
  %v306 = vadd.f32 0.0, %v305
  %307 = vmatmul.f32.gmra.mxu0 %v257
  %v308 = vpop.f32.mrf.mxu0
  %v309 = vadd.f32 0.0, %v308
  %310 = vdwg.mxu0
  %v312 = vsel %vm77, %v247, 0
  %v315 = vsel %vm77, %v248, 0
  %v318 = vsel %vm77, %v249, 0
  %v321 = vsel %vm77, %v250, 0
  %v324 = vsel %vm77, %v277, 0
  %v327 = vsel %vm77, %v280, 0
  %v330 = vsel %vm77, %v283, 0
  %332 = vmatpush.xpose.msra.mxu0 0.0
  %333 = vmatpush.xpose.msra.mxu0 0.0
  %334 = vmatpush.xpose.msra.mxu0 0.0
  %335 = vmatpush.xpose.msra.mxu0 0.0
  %336 = vmatpush.xpose.msra.mxu0 0.0
  %337 = vmatpush.xpose.msra.mxu0 0.0
  %338 = vmatpush.xpose.msra.mxu0 0.0
  %339 = vmatpush.xpose.msra.mxu0 0.0
  %340 = vmatpush.xpose.msra.mxu0 0.0
  %341 = vmatpush.xpose.msra.mxu0 0.0
  %342 = vmatpush.xpose.msra.mxu0 0.0
  %343 = vmatpush.xpose.msra.mxu0 0.0
  %344 = vmatpush.xpose.msra.mxu0 0.0
  %345 = vmatpush.xpose.msra.mxu0 %v330
  %346 = vmatpush.xpose.msra.mxu0 %v327
  %347 = vmatpush.xpose.msra.mxu0 %v324
  %348 = vmatmul.f32.gmra.mxu0 %v312
  %v349 = vpop.f32.mrf.mxu0
  %v350 = vadd.f32 0.0, %v349
  %351 = vmatmul.f32.gmra.mxu0 %v315
  %v352 = vpop.f32.mrf.mxu0
  %v353 = vadd.f32 0.0, %v352
  %354 = vmatmul.f32.gmra.mxu0 %v318
  %v355 = vpop.f32.mrf.mxu0
  %v356 = vadd.f32 0.0, %v355
  %357 = vmatmul.f32.gmra.mxu0 %v321
  %v358 = vpop.f32.mrf.mxu0
  %v359 = vadd.f32 0.0, %v358
  %360 = vdwg.mxu0
  %v361 = vmul.f32 %v350, 0.35355338
  %v362 = vmul.f32 %v353, 0.35355338
  %v363 = vmul.f32 %v356, 0.35355338
  %v364 = vmul.f32 %v359, 0.35355338
  %v365 = vadd.f32 %v361, %v60
  %v366 = vadd.f32 %v362, %v61
  %v367 = vadd.f32 %v363, %v62
  %v368 = vadd.f32 %v364, %v63
  %v369 = vsel %vm160, %v365, -inf
  %370 = vmax.xlane.f32.xlu0 %v369
  %v371 = vpop.xlane.xlu0 %370
  %v372 = vsel %vm160, %v366, -inf
  %373 = vmax.xlane.f32.xlu0 %v372
  %v374 = vpop.xlane.xlu0 %373
  %v375 = vsel %vm160, %v367, -inf
  %376 = vmax.xlane.f32.xlu0 %v375
  %v377 = vpop.xlane.xlu0 %376
  %v378 = vsel %vm160, %v368, -inf
  %379 = vmax.xlane.f32.xlu0 %v378
  %v380 = vpop.xlane.xlu0 %379
  %v381 = vsub.f32 %v365, %v371
  %v382 = vsub.f32 %v366, %v374
  %v383 = vsub.f32 %v367, %v377
  %v384 = vsub.f32 %v368, %v380
  %v385 = vmul.f32 %v381, 1.442695
  %v386 = vpow.pop %v385
  %v387 = vmul.f32 %v382, 1.442695
  %v388 = vpow.pop %v387
  %v389 = vmul.f32 %v383, 1.442695
  %v390 = vpow.pop %v389
  %v391 = vmul.f32 %v384, 1.442695
  %v392 = vpow.pop %v391
  %v393 = vsel %vm160, %v386, 0.0
  %394 = vadd.xlane.f32.xlu0 %v393
  %v395 = vpop.xlane.xlu0 %394
  %v396 = vsel %vm160, %v388, 0.0
  %397 = vadd.xlane.f32.xlu0 %v396
  %v398 = vpop.xlane.xlu0 %397
  %v399 = vsel %vm160, %v390, 0.0
  %400 = vadd.xlane.f32.xlu0 %v399
  %v401 = vpop.xlane.xlu0 %400
  %v402 = vsel %vm160, %v392, 0.0
  %403 = vadd.xlane.f32.xlu0 %v402
  %v404 = vpop.xlane.xlu0 %403
  %v405 = vrcp.pop %v395
  %v406 = vrcp.pop %v398
  %v407 = vrcp.pop %v401
  %v408 = vrcp.pop %v404
  %v409 = vmul.f32 %v386, %v405
  %v410 = vmul.f32 %v388, %v406
  %v411 = vmul.f32 %v390, %v407
  %v412 = vmul.f32 %v392, %v408
  %v413 = vperm.slane %v50, 0
  %v414 = vmul.f32 %v303, %v413
  %v415 = vmul.f32 %v306, %v413
  %v416 = vmul.f32 %v309, %v413
  %v417 = vperm.slane %v51, 0
  %v418 = vmul.f32 %v303, %v417
  %v419 = vmul.f32 %v306, %v417
  %v420 = vmul.f32 %v309, %v417
  %v422 = vsel %vm160, %v410, 0
  %v425 = vsel %vm173, %v420, 0
  %427 = vmatpush.msra.mxu0 0.0
  %428 = vmatpush.msra.mxu0 0.0
  %429 = vmatpush.msra.mxu0 0.0
  %430 = vmatpush.msra.mxu0 0.0
  %431 = vmatpush.msra.mxu0 0.0
  %432 = vmatpush.msra.mxu0 0.0
  %433 = vmatpush.msra.mxu0 0.0
  %434 = vmatpush.msra.mxu0 0.0
  %435 = vmatpush.msra.mxu0 0.0
  %436 = vmatpush.msra.mxu0 0.0
  %437 = vmatpush.msra.mxu0 0.0
  %438 = vmatpush.msra.mxu0 0.0
  %439 = vmatpush.msra.mxu0 0.0
  %440 = vmatpush.msra.mxu0 %v425
  %441 = vmatpush.msra.mxu0 %v419
  %442 = vmatpush.msra.mxu0 %v418
  %443 = vmatmul.f32.gmra.mxu0 %v422
  %v444 = vpop.f32.mrf.mxu0
  %v445 = vadd.f32 0.0, %v444
  %446 = vdwg.mxu0
  %v448 = vsel %vm160, %v409, 0
  %v451 = vsel %vm173, %v416, 0
  %453 = vmatpush.msra.mxu0 0.0
  %454 = vmatpush.msra.mxu0 0.0
  %455 = vmatpush.msra.mxu0 0.0
  %456 = vmatpush.msra.mxu0 0.0
  %457 = vmatpush.msra.mxu0 0.0
  %458 = vmatpush.msra.mxu0 0.0
  %459 = vmatpush.msra.mxu0 0.0
  %460 = vmatpush.msra.mxu0 0.0
  %461 = vmatpush.msra.mxu0 0.0
  %462 = vmatpush.msra.mxu0 0.0
  %463 = vmatpush.msra.mxu0 0.0
  %464 = vmatpush.msra.mxu0 0.0
  %465 = vmatpush.msra.mxu0 0.0
  %466 = vmatpush.msra.mxu0 %v451
  %467 = vmatpush.msra.mxu0 %v415
  %468 = vmatpush.msra.mxu0 %v414
  %469 = vmatmul.f32.gmra.mxu0 %v448
  %v470 = vpop.f32.mrf.mxu0
  %v471 = vadd.f32 %v445, %v470
  %472 = vdwg.mxu0
  %v473 = vperm.slane %v52, 0
  %v474 = vmul.f32 %v303, %v473
  %v475 = vmul.f32 %v306, %v473
  %v476 = vmul.f32 %v309, %v473
  %v478 = vsel %vm160, %v411, 0
  %v481 = vsel %vm173, %v476, 0
  %483 = vmatpush.msra.mxu0 0.0
  %484 = vmatpush.msra.mxu0 0.0
  %485 = vmatpush.msra.mxu0 0.0
  %486 = vmatpush.msra.mxu0 0.0
  %487 = vmatpush.msra.mxu0 0.0
  %488 = vmatpush.msra.mxu0 0.0
  %489 = vmatpush.msra.mxu0 0.0
  %490 = vmatpush.msra.mxu0 0.0
  %491 = vmatpush.msra.mxu0 0.0
  %492 = vmatpush.msra.mxu0 0.0
  %493 = vmatpush.msra.mxu0 0.0
  %494 = vmatpush.msra.mxu0 0.0
  %495 = vmatpush.msra.mxu0 0.0
  %496 = vmatpush.msra.mxu0 %v481
  %497 = vmatpush.msra.mxu0 %v475
  %498 = vmatpush.msra.mxu0 %v474
  %499 = vmatmul.f32.gmra.mxu0 %v478
  %v500 = vpop.f32.mrf.mxu0
  %v501 = vadd.f32 0.0, %v500
  %502 = vdwg.mxu0
  %v503 = vadd.f32 %v471, %v501
  %v504 = vperm.slane %v53, 0
  %v505 = vmul.f32 %v303, %v504
  %v506 = vmul.f32 %v306, %v504
  %v507 = vmul.f32 %v309, %v504
  %v509 = vsel %vm160, %v412, 0
  %v512 = vsel %vm173, %v507, 0
  %514 = vmatpush.msra.mxu0 0.0
  %515 = vmatpush.msra.mxu0 0.0
  %516 = vmatpush.msra.mxu0 0.0
  %517 = vmatpush.msra.mxu0 0.0
  %518 = vmatpush.msra.mxu0 0.0
  %519 = vmatpush.msra.mxu0 0.0
  %520 = vmatpush.msra.mxu0 0.0
  %521 = vmatpush.msra.mxu0 0.0
  %522 = vmatpush.msra.mxu0 0.0
  %523 = vmatpush.msra.mxu0 0.0
  %524 = vmatpush.msra.mxu0 0.0
  %525 = vmatpush.msra.mxu0 0.0
  %526 = vmatpush.msra.mxu0 0.0
  %527 = vmatpush.msra.mxu0 %v512
  %528 = vmatpush.msra.mxu0 %v506
  %529 = vmatpush.msra.mxu0 %v505
  %530 = vmatmul.f32.gmra.mxu0 %v509
  %v531 = vpop.f32.mrf.mxu0
  %v532 = vadd.f32 0.0, %v531
  %533 = vdwg.mxu0
  %v534 = vadd.f32 %v503, %v532
  %v536 = vsel %vm77, %v534, 0
  %538 = vmatpush.msra.mxu0 0.0
  %539 = vmatpush.msra.mxu0 0.0
  %540 = vmatpush.msra.mxu0 0.0
  %541 = vmatpush.msra.mxu0 0.0
  %542 = vmatpush.msra.mxu0 0.0
  %543 = vmatpush.msra.mxu0 0.0
  %544 = vmatpush.msra.mxu0 0.0
  %545 = vmatpush.msra.mxu0 0.0
  %546 = vmatpush.msra.mxu0 0.0
  %547 = vmatpush.msra.mxu0 0.0
  %548 = vmatpush.msra.mxu0 0.0
  %549 = vmatpush.msra.mxu0 0.0
  %550 = vmatpush.msra.mxu0 %v29
  %551 = vmatpush.msra.mxu0 %v28
  %552 = vmatpush.msra.mxu0 %v27
  %553 = vmatpush.msra.mxu0 %v26
  %554 = vmatmul.f32.gmra.mxu0 %v536
  %v555 = vpop.f32.mrf.mxu0
  %v556 = vadd.f32 0.0, %v555
  %557 = vdwg.mxu0
  %v559 = vsel %vm160, %v58, 0
  %v562 = vsel %vm173, %v76, 0
  %564 = vmatpush.msra.mxu0 0.0
  %565 = vmatpush.msra.mxu0 0.0
  %566 = vmatpush.msra.mxu0 0.0
  %567 = vmatpush.msra.mxu0 0.0
  %568 = vmatpush.msra.mxu0 0.0
  %569 = vmatpush.msra.mxu0 0.0
  %570 = vmatpush.msra.mxu0 0.0
  %571 = vmatpush.msra.mxu0 0.0
  %572 = vmatpush.msra.mxu0 0.0
  %573 = vmatpush.msra.mxu0 0.0
  %574 = vmatpush.msra.mxu0 0.0
  %575 = vmatpush.msra.mxu0 0.0
  %576 = vmatpush.msra.mxu0 0.0
  %577 = vmatpush.msra.mxu0 %v562
  %578 = vmatpush.msra.mxu0 %v75
  %579 = vmatpush.msra.mxu0 %v74
  %580 = vmatmul.f32.gmra.mxu0 %v559
  %v581 = vpop.f32.mrf.mxu0
  %v582 = vadd.f32 %v556, %v581
  %583 = vdwg.mxu0
  %v584 = vsel %vm77, %v582, 0.0
  %585 = vadd.xlane.f32.xlu0 %v584
  %v586 = vpop.xlane.xlu0 %585
  %v587 = vmul.f32 %v586, %v94
  %v588 = vsub.f32 %v582, %v587
  %v589 = vmul.f32 %v588, %v588
  %v590 = vsel %vm77, %v589, 0.0
  %591 = vadd.xlane.f32.xlu0 %v590
  %v592 = vpop.xlane.xlu0 %591
  %v593 = vmul.f32 %v592, %v94
  %v594 = vadd.f32 %v593, 1e-05
  %v595 = vrsqrt.pop %v594
  %v596 = vmul.f32 %v595, %v594
  %v597 = vmul.f32 %v596, %v595
  %v598 = vmul.f32 0.5, %v597
  %v599 = vsub.f32 1.5, %v598
  %v600 = vmul.f32 %v595, %v599
  %vm601 = vweird.f32 %v594
  %vm602 = vweird.f32 %v595
  %vm603 = vmor %vm601, %vm602
  %v604 = vsel %vm603, %v595, %v600
  %v605 = vmul.f32 %v588, %v604
  %v606 = vperm.slane %v48, 0
  %v607 = vmul.f32 %v605, %v606
  %v608 = vperm.slane %v49, 0
  %v609 = vadd.f32 %v607, %v608
  %v611 = vsel %vm77, %v609, 0
  %613 = vmatpush.msra.mxu0 0.0
  %614 = vmatpush.msra.mxu0 0.0
  %615 = vmatpush.msra.mxu0 0.0
  %616 = vmatpush.msra.mxu0 0.0
  %617 = vmatpush.msra.mxu0 0.0
  %618 = vmatpush.msra.mxu0 0.0
  %619 = vmatpush.msra.mxu0 0.0
  %620 = vmatpush.msra.mxu0 0.0
  %621 = vmatpush.msra.mxu0 0.0
  %622 = vmatpush.msra.mxu0 0.0
  %623 = vmatpush.msra.mxu0 0.0
  %624 = vmatpush.msra.mxu0 0.0
  %625 = vmatpush.msra.mxu0 %v67
  %626 = vmatpush.msra.mxu0 %v66
  %627 = vmatpush.msra.mxu0 %v65
  %628 = vmatpush.msra.mxu0 %v64
  %629 = vmatmul.f32.gmra.mxu0 %v611
  %v630 = vpop.f32.mrf.mxu0
  %v631 = vadd.f32 0.0, %v630
  %632 = vdwg.mxu0
  %v633 = vmul.f32 %v631, %v631
  %v634 = vmul.f32 %v631, %v633
  %v635 = vmul.f32 %v634, 0.044715
  %v636 = vadd.f32 %v631, %v635
  %v637 = vmul.f32 %v636, 0.7978846
  %v638 = vtanh.pop %v637
  %v639 = vadd.f32 %v638, 1.0
  %v640 = vmul.f32 %v639, 0.5
  %v641 = vmul.f32 %v631, %v640
  %642 = vmatpush.msra.mxu0 %v45
  %643 = vmatpush.msra.mxu0 %v44
  %644 = vmatpush.msra.mxu0 %v43
  %645 = vmatpush.msra.mxu0 %v42
  %646 = vmatpush.msra.mxu0 %v41
  %647 = vmatpush.msra.mxu0 %v40
  %648 = vmatpush.msra.mxu0 %v39
  %649 = vmatpush.msra.mxu0 %v38
  %650 = vmatpush.msra.mxu0 %v37
  %651 = vmatpush.msra.mxu0 %v36
  %652 = vmatpush.msra.mxu0 %v35
  %653 = vmatpush.msra.mxu0 %v34
  %654 = vmatpush.msra.mxu0 %v33
  %655 = vmatpush.msra.mxu0 %v32
  %656 = vmatpush.msra.mxu0 %v31
  %657 = vmatpush.msra.mxu0 %v30
  %658 = vmatmul.f32.gmra.mxu0 %v641
  %v659 = vpop.f32.mrf.mxu0
  %v660 = vadd.f32 0.0, %v659
  %661 = vdwg.mxu0
  %v662 = vadd.f32 %v582, %v660
  %v664 = vsel %vm77, %v662, 0
  %666 = vmatpush.msra.mxu0 0.0
  %667 = vmatpush.msra.mxu0 0.0
  %668 = vmatpush.msra.mxu0 0.0
  %669 = vmatpush.msra.mxu0 0.0
  %670 = vmatpush.msra.mxu0 0.0
  %671 = vmatpush.msra.mxu0 0.0
  %672 = vmatpush.msra.mxu0 0.0
  %673 = vmatpush.msra.mxu0 0.0
  %674 = vmatpush.msra.mxu0 0.0
  %675 = vmatpush.msra.mxu0 0.0
  %676 = vmatpush.msra.mxu0 0.0
  %677 = vmatpush.msra.mxu0 0.0
  %678 = vmatpush.msra.mxu0 %v71
  %679 = vmatpush.msra.mxu0 %v70
  %680 = vmatpush.msra.mxu0 %v69
  %681 = vmatpush.msra.mxu0 %v68
  %682 = vmatmul.f32.gmra.mxu0 %v664
  %v683 = vpop.f32.mrf.mxu0
  %v684 = vadd.f32 0.0, %v683
  %685 = vdwg.mxu0
  %v686 = vmul.f32 %v684, %v72
  %vm687 = vcmask 64512
  %v689 = vsel %vm687, %v59, 0
  %691 = vmatpush.msra.mxu0 0.0
  %692 = vmatpush.msra.mxu0 0.0
  %693 = vmatpush.msra.mxu0 0.0
  %694 = vmatpush.msra.mxu0 0.0
  %695 = vmatpush.msra.mxu0 0.0
  %696 = vmatpush.msra.mxu0 0.0
  %697 = vmatpush.msra.mxu0 0.0
  %698 = vmatpush.msra.mxu0 0.0
  %699 = vmatpush.msra.mxu0 0.0
  %700 = vmatpush.msra.mxu0 0.0
  %701 = vmatpush.msra.mxu0 0.0
  %702 = vmatpush.msra.mxu0 0.0
  %703 = vmatpush.msra.mxu0 0.0
  %704 = vmatpush.msra.mxu0 0.0
  %705 = vmatpush.msra.mxu0 0.0
  %706 = vmatpush.msra.mxu0 %v686
  %707 = vmatmul.f32.gmra.mxu0 %v689
  %v708 = vpop.f32.mrf.mxu0
  %v709 = vadd.f32 %v73, %v708
  %710 = vdwg.mxu0
  %711 = vst [vmem:[%s3] sm:$0x3] %v709
  // Predicated region
  $region14: #{lm_inference.1} parent=0 // pred_check
    _
  $region15: #{lm_inference.1} parent=0 // pred_check_branch
    %713 = sbr.rel (0) target = $region17
  $region16: #{lm_inference.1} parent=0 // pred_region
    _
  $region17: #{lm_inference.1} parent=0 // pred_fallthru
    _
  // Predicated region
  $region18: #{lm_inference.1} parent=0 // pred_check
    _
  $region19: #{lm_inference.1} parent=0 // pred_check_branch
    %715 = sbr.rel (0) target = $region21
  $region20: #{lm_inference.1} parent=0 // pred_region
    _
  $region21: #{lm_inference.1} parent=0 // pred_fallthru
    _

</llo_original>
